<compile_context>
chip_gen: v6e
topology: v6e:2x2x1
jax: 0.10.0
libtpu: 0.0.40
codegen_flags: <defaults>
</compile_context>

<pallas_src>
import jax
import jax.numpy as jnp
from jax.experimental import pallas as pl
from jax.experimental.pallas import tpu as pltpu


# --------------------------------------------------------------------------
# Hardware / policy helpers
# --------------------------------------------------------------------------

def _tpu_generation_info():
    """Returns (physical_vmem_bytes, has_two_tensorcores, is_v5e).

    Conservative fallbacks (64 MiB, two_tc=True) if the query fails, so a
    wrong guess only shrinks tiles, never overflows VMEM."""
    vmem_bytes = 64 * 1024 * 1024
    kind = ""
    try:
        vmem_bytes = int(pltpu.get_tpu_info().vmem_capacity_bytes)
    except Exception:
        pass
    try:
        kind = jax.devices()[0].device_kind.lower()
    except Exception:
        pass
    if "v7" in kind:
        two_tc = True
    elif ("v5" in kind) or ("v6" in kind):
        two_tc = False
    else:
        two_tc = vmem_bytes <= 64 * 1024 * 1024
    is_v5e = ("v5 lite" in kind) or ("v5e" in kind) or ("v5litepod" in kind)
    return vmem_bytes, two_tc, is_v5e


def _largest_divisor_le(n, limit):
    best = 1
    for d in range(1, n + 1):
        if n % d == 0 and d <= limit:
            best = d
    return best


_TARGET_TILE_BYTES = 8 * 1024 * 1024          # ~6-8 MiB-class x tiles
_TINY_INPUT_BYTES = 2 * 1024 * 1024           # below this: one block, grid=(1,)
_MIN_VMEM_LIMIT = 16 * 1024 * 1024


# --------------------------------------------------------------------------
# Two-pass fallback (VMEM-constrained feature maps, mainly v7x 64 MiB/TC)
# --------------------------------------------------------------------------

def _se_mask_two_pass(x2, w1t, w2t, c_row, hw_row, *, B, C, HWp, out_dtype,
                      itemsize, compute_dtype, ew_f32, vmem_cap):
    """Pass 1: accumulate pooled channel sums over H*W chunks (f32 accumulator,
    pl.when init).  Tiny SE gemvs + sigmoid + c-mask fold run in plain XLA.
    Pass 2: fused SE/mask scaling, chunked over H*W.  One extra read of x."""
    cbytes = jnp.dtype(compute_dtype).itemsize

    # Lane-chunk size: multiple of 128 dividing HWp, ~<= 8 MiB, fits VMEM cap.
    m = HWp // 128
    tl = 128
    for k in range(1, m + 1):
        if m % k:
            continue
        cand = 128 * k
        tile = C * cand * itemsize
        est = 2 * (tile + tile) + C * cand * cbytes
        if tile <= _TARGET_TILE_BYTES and est <= vmem_cap:
            tl = cand
    n_chunks = HWp // tl

    # ---- pass 1: pooled sums --------------------------------------------
    est_a = 2 * (C * tl * itemsize + C * 4) + C * tl * 4
    vmem_a = int(min(max(int(1.25 * est_a), _MIN_VMEM_LIMIT), vmem_cap))

    def pool_kernel(x_ref, sum_ref):
        @pl.when(pl.program_id(1) == 0)
        def _():
            sum_ref[...] = jnp.zeros_like(sum_ref)
        sum_ref[...] += jnp.sum(x_ref[...], axis=-1,
                                dtype=jnp.float32)[:, None, :]

    pooled = pl.pallas_call(
        pool_kernel,
        out_shape=jax.ShapeDtypeStruct((B, 1, C), jnp.float32),
        grid_spec=pltpu.PrefetchScalarGridSpec(
            num_scalar_prefetch=0,
            grid=(B, n_chunks),
            in_specs=[pl.BlockSpec((1, C, tl), lambda b, l: (b, 0, l))],
            out_specs=pl.BlockSpec((1, 1, C), lambda b, l: (b, 0, 0)),
        ),
        compiler_params=pltpu.CompilerParams(
            dimension_semantics=("parallel", "arbitrary"),
            vmem_limit_bytes=vmem_a),
    )(x2)

    # ---- tiny SE gemvs (negligible next to the two H*W-sized HBM passes) --
    sums = pooled.reshape(B, C)
    h1 = jnp.maximum(sums @ w1t, 0.0)            # w1t already carries 1/(H*W)
    s = jax.nn.sigmoid(h1 @ w2t)
    cc = (s * c_row).astype(compute_dtype).reshape(B, C, 1)

    # ---- pass 2: fused SE + mask scaling ----------------------------------
    est_b = (2 * (2 * C * tl * itemsize) + C * tl * cbytes
             + 2 * (C * cbytes + tl * cbytes))
    vmem_b = int(min(max(int(1.25 * est_b), _MIN_VMEM_LIMIT), vmem_cap))

    def scale_kernel(x_ref, cc_ref, hw_ref, o_ref):
        xv = x_ref[...]                              # (1, C, tl)
        if ew_f32:
            xv = xv.astype(jnp.float32)
        out = xv * cc_ref[...] * hw_ref[...][None, :, :]
        o_ref[...] = out.astype(o_ref.dtype)

    return pl.pallas_call(
        scale_kernel,
        out_shape=jax.ShapeDtypeStruct((B, C, HWp), out_dtype),
        grid_spec=pltpu.PrefetchScalarGridSpec(
            num_scalar_prefetch=0,
            grid=(B, n_chunks),
            in_specs=[
                pl.BlockSpec((1, C, tl), lambda b, l: (b, 0, l)),   # x chunk
                pl.BlockSpec((1, C, 1), lambda b, l: (b, 0, 0)),    # SE*c scale
                pl.BlockSpec((1, tl), lambda b, l: (0, l)),         # h*w mask
            ],
            out_specs=pl.BlockSpec((1, C, tl), lambda b, l: (b, 0, l)),
        ),
        compiler_params=pltpu.CompilerParams(
            dimension_semantics=("parallel", "parallel"),
            vmem_limit_bytes=vmem_b),
    )(x2, cc, hw_row)


# --------------------------------------------------------------------------
# Main entry point
# --------------------------------------------------------------------------

def se_mask_block(x, w1, w2, c_mask, h_mask, w_mask, *, force_two_pass=False):
    """x: (B, C, H, W).  w1: (C//r, C), w2: (C, C//r),
    c_mask: (1, C), h_mask: (1, H), w_mask: (1, W)  (PyTorch parameter shapes)."""
    B, C, H, W = x.shape
    HW = H * W
    Cr = w1.shape[0]

    vmem_phys, two_tc, is_v5e = _tpu_generation_info()
    vmem_cap = int(0.6 * vmem_phys)                 # headroom for compiler scratch

    itemsize = jnp.dtype(x.dtype).itemsize
    ew_f32 = (x.dtype == jnp.float32) or is_v5e     # f32 elementwise only if needed
    compute_dtype = jnp.float32 if ew_f32 else x.dtype
    cbytes = jnp.dtype(compute_dtype).itemsize

    # ---- wrapper-side glue: lane-dense (B, C, HWp) layout ------------------
    HWp = -(-HW // 128) * 128                       # pad H*W up to multiple of 128
    x2 = x.reshape(B, C, HW)
    hw_row = (h_mask.reshape(H, 1) * w_mask.reshape(1, W)).reshape(1, HW)
    if HWp != HW:
        x2 = jnp.pad(x2, ((0, 0), (0, 0), (0, HWp - HW)))
        hw_row = jnp.pad(hw_row, ((0, 0), (0, HWp - HW)))
    hw_row = hw_row.astype(compute_dtype)
    w1t = (jnp.transpose(w1) * (1.0 / HW)).astype(jnp.float32)   # fold 1/(H*W)
    w2t = jnp.transpose(w2).astype(jnp.float32)
    c_row = c_mask.reshape(1, C).astype(jnp.float32)

    # One consistent VMEM estimate: 2x double-buffered in+out (x.dtype) +
    # one full-block elementwise temporary + double-buffered params.
    params_bytes = 2 * ((C * Cr + Cr * C + C) * 4 + HWp * cbytes)

    def est_single(bt):
        tile = bt * C * HWp * itemsize
        temp = bt * C * HWp * cbytes
        return 2 * (tile + tile) + temp + params_bytes

    if force_two_pass or est_single(1) > vmem_cap:
        out2 = _se_mask_two_pass(
            x2, w1t, w2t, c_row, hw_row, B=B, C=C, HWp=HWp, out_dtype=x.dtype,
            itemsize=itemsize, compute_dtype=compute_dtype, ew_f32=ew_f32,
            vmem_cap=vmem_cap)
        out2 = out2[:, :, :HW] if HWp != HW else out2
        return out2.reshape(B, C, H, W)

    # ---- single-pass tile policy -------------------------------------------
    divisors = [d for d in range(1, B + 1) if B % d == 0]
    feasible = [d for d in divisors if est_single(d) <= vmem_cap]   # non-empty here
    under = [d for d in feasible if d * C * HWp * itemsize <= _TARGET_TILE_BYTES]
    bt = max(under) if under else 1
    if two_tc and B >= 2:
        # Keep >= 2 grid steps only where there are 2 TensorCores to feed.
        bt = min(bt, _largest_divisor_le(B, max(1, B // 2)))
    if B * C * HWp * itemsize <= _TINY_INPUT_BYTES:
        # Tiny input: one block, grid=(1,); per-step overhead dominates otherwise.
        bt = max(feasible)
    grid = (B // bt,)
    vmem_limit = int(min(max(int(1.25 * est_single(bt)), _MIN_VMEM_LIMIT), vmem_cap))

    # ---- fused single-pass kernel ------------------------------------------
    def kernel(x_ref, w1_ref, w2_ref, c_ref, hw_ref, o_ref):
        xv = x_ref[...]                                      # (bt, C, HWp)
        # SE squeeze: pooled SUM in f32; 1/(H*W) is folded into w1t.
        y = jnp.sum(xv, axis=-1, dtype=jnp.float32)          # (bt, C)
        # fc1 (no bias) + ReLU, fc2 (no bias) + sigmoid  (y @ W^T pre-transposed)
        h1 = jnp.maximum(
            jnp.dot(y, w1_ref[...], preferred_element_type=jnp.float32), 0.0)
        s = jax.nn.sigmoid(
            jnp.dot(h1, w2_ref[...], preferred_element_type=jnp.float32))
        cc = s * c_ref[...]                                  # (bt, C) f32, SE*c fused
        if ew_f32:
            out = xv.astype(jnp.float32) * cc[:, :, None] * hw_ref[...][None, :, :]
        else:
            out = xv * cc.astype(xv.dtype)[:, :, None] * hw_ref[...][None, :, :]
        o_ref[...] = out.astype(o_ref.dtype)

    out2 = pl.pallas_call(
        kernel,
        out_shape=jax.ShapeDtypeStruct((B, C, HWp), x.dtype),
        grid_spec=pltpu.PrefetchScalarGridSpec(
            num_scalar_prefetch=0,
            grid=grid,
            in_specs=[
                pl.BlockSpec((bt, C, HWp), lambda b: (b, 0, 0)),   # x (lane-dense)
                pl.BlockSpec((C, Cr), lambda b: (0, 0)),           # fc1 weight^T / HW
                pl.BlockSpec((Cr, C), lambda b: (0, 0)),           # fc2 weight^T
                pl.BlockSpec((1, C), lambda b: (0, 0)),            # channel mask
                pl.BlockSpec((1, HWp), lambda b: (0, 0)),          # h*w mask row
            ],
            out_specs=pl.BlockSpec((bt, C, HWp), lambda b: (b, 0, 0)),
        ),
        compiler_params=pltpu.CompilerParams(
            dimension_semantics=("parallel",),
            vmem_limit_bytes=vmem_limit),
    )(x2, w1t, w2t, c_row, hw_row)

    out2 = out2[:, :, :HW] if HWp != HW else out2
    return out2.reshape(B, C, H, W)
    # TODO(synk): if profiling ever shows the tiny SE gemvs exposed at very
    # small tiles, swap jnp.dot for a VPU broadcast-multiply-reduce.


# --------------------------------------------------------------------------
# Pure-JAX reference (mirrors the PyTorch forward)
# --------------------------------------------------------------------------

def se_mask_block_ref(x, w1, w2, c_mask, h_mask, w_mask):
    B, C, H, W = x.shape
    y = jnp.mean(x, axis=(2, 3))                      # (B, C)
    y = jnp.maximum(y @ w1.T, 0.0)                    # (B, C//r)
    y = jax.nn.sigmoid(y @ w2.T)                      # (B, C)
    out = x * y[:, :, None, None]
    out = out * c_mask.reshape(1, C, 1, 1)
    out = out * h_mask.reshape(1, 1, H, 1)
    out = out * w_mask.reshape(1, 1, 1, W)
    return out


if __name__ == "__main__":
    B, C, H, W = 2, 32, 16, 16        # channel=32, shape=(32, 16, 16)
    reduction = 16
    Cr = C // reduction               # 2

    key = jax.random.PRNGKey(0)
    kx, k1, k2, kc, kh, kw, kx2 = jax.random.split(key, 7)

    x = jax.random.normal(kx, (B, C, H, W), dtype=jnp.float32)
    w1 = 0.1 * jax.random.normal(k1, (Cr, C), dtype=jnp.float32)    # fc[0].weight
    w2 = 0.1 * jax.random.normal(k2, (C, Cr), dtype=jnp.float32)    # fc[2].weight
    c_mask = 1.0 + 0.1 * jax.random.normal(kc, (1, C), dtype=jnp.float32)
    h_mask = 1.0 + 0.1 * jax.random.normal(kh, (1, H), dtype=jnp.float32)
    w_mask = 1.0 + 0.1 * jax.random.normal(kw, (1, W), dtype=jnp.float32)

    ref = se_mask_block_ref(x, w1, w2, c_mask, h_mask, w_mask)

    # 1) default single-pass fused kernel
    out = jax.block_until_ready(se_mask_block(x, w1, w2, c_mask, h_mask, w_mask))
    assert out.shape == (B, C, H, W)
    assert jnp.allclose(out, ref, atol=1e-5, rtol=1e-5), "single-pass mismatch"

    # 2) forced two-pass (VMEM-fallback) path
    out_tp = jax.block_until_ready(
        se_mask_block(x, w1, w2, c_mask, h_mask, w_mask, force_two_pass=True))
    assert jnp.allclose(out_tp, ref, atol=1e-5, rtol=1e-5), "two-pass mismatch"

    # 3) non-multiple-of-128 spatial size (exercises the H*W lane padding)
    H2, W2 = 14, 14
    x14 = jax.random.normal(kx2, (B, C, H2, W2), dtype=jnp.float32)
    h_mask2, w_mask2 = h_mask[:, :H2], w_mask[:, :W2]
    ref14 = se_mask_block_ref(x14, w1, w2, c_mask, h_mask2, w_mask2)
    out14 = jax.block_until_ready(
        se_mask_block(x14, w1, w2, c_mask, h_mask2, w_mask2))
    assert jnp.allclose(out14, ref14, atol=1e-5, rtol=1e-5), "padded-HW mismatch"

    # 4) bf16 input (exercises the low-precision elementwise path on v6e/v7x)
    x_bf = x.astype(jnp.bfloat16)
    ref_bf = se_mask_block_ref(x_bf.astype(jnp.float32), w1, w2, c_mask, h_mask, w_mask)
    out_bf = jax.block_until_ready(se_mask_block(x_bf, w1, w2, c_mask, h_mask, w_mask))
    assert out_bf.dtype == jnp.bfloat16
    assert jnp.allclose(out_bf.astype(jnp.float32), ref_bf,
                        atol=5e-2, rtol=5e-2), "bf16 mismatch"

    print("KERNEL_OK")
</pallas_src>

<mosaic_0001>
module attributes {stable_mosaic.version = 11 : i64} {
  func.func @kernel(%arg0: i32, %arg1: memref<2x32x256xf32, #tpu.memory_space<vmem>>, %arg2: memref<32x2xf32, #tpu.memory_space<vmem>>, %arg3: memref<2x32xf32, #tpu.memory_space<vmem>>, %arg4: memref<1x32xf32, #tpu.memory_space<vmem>>, %arg5: memref<1x256xf32, #tpu.memory_space<vmem>>, %arg6: memref<2x32x256xf32, #tpu.memory_space<vmem>>) attributes {dimension_semantics = [#tpu.dimension_semantics<parallel>], iteration_bounds = array<i64: 1>, scalar_prefetch = 0 : i64, scratch_operands = 0 : i64, tpu.core_type = #tpu.core_type<tc>, window_params = [{transform_indices = @transform_0, window_bounds = array<i64: 2, 32, 256>}, {pipeline_mode = #tpu.pipeline_mode<synchronous>, transform_indices = @transform_1, window_bounds = array<i64: 32, 2>}, {pipeline_mode = #tpu.pipeline_mode<synchronous>, transform_indices = @transform_2, window_bounds = array<i64: 2, 32>}, {pipeline_mode = #tpu.pipeline_mode<synchronous>, transform_indices = @transform_3, window_bounds = array<i64: 1, 32>}, {pipeline_mode = #tpu.pipeline_mode<synchronous>, transform_indices = @transform_4, window_bounds = array<i64: 1, 256>}, {transform_indices = @transform_5, window_bounds = array<i64: 2, 32, 256>}]} {
    %c0 = arith.constant 0 : index
    %c0_0 = arith.constant 0 : index
    %c0_1 = arith.constant 0 : index
    %0 = vector.load %arg1[%c0, %c0_0, %c0_1] : memref<2x32x256xf32, #tpu.memory_space<vmem>>, vector<2x32x256xf32>
    %cst = arith.constant dense<0.000000e+00> : vector<2x32xf32>
    %1 = vector.multi_reduction <add>, %0, %cst [2] : vector<2x32x256xf32> to vector<2x32xf32>
    %c0_2 = arith.constant 0 : index
    %c0_3 = arith.constant 0 : index
    %2 = vector.load %arg2[%c0_2, %c0_3] : memref<32x2xf32, #tpu.memory_space<vmem>>, vector<32x2xf32>
    %cst_4 = arith.constant dense<0.000000e+00> : vector<2x2xf32>
    %3 = tpu.matmul %1, %2, %cst_4 {dimension_numbers = #tpu.dot_dimension_numbers<[1], [0], [0], [1], [0, 0, 1, 1], [], []>} : vector<2x32xf32>, vector<32x2xf32>, vector<2x2xf32> -> vector<2x2xf32>
    %cst_5 = arith.constant 0.000000e+00 : f32
    %4 = vector.broadcast %cst_5 : f32 to vector<2x2xf32>
    %5 = arith.maximumf %3, %4 : vector<2x2xf32>
    %c0_6 = arith.constant 0 : index
    %c0_7 = arith.constant 0 : index
    %6 = vector.load %arg3[%c0_6, %c0_7] : memref<2x32xf32, #tpu.memory_space<vmem>>, vector<2x32xf32>
    %cst_8 = arith.constant dense<0.000000e+00> : vector<2x32xf32>
    %7 = tpu.matmul %5, %6, %cst_8 {dimension_numbers = #tpu.dot_dimension_numbers<[1], [0], [0], [1], [0, 0, 1, 1], [], []>} : vector<2x2xf32>, vector<2x32xf32>, vector<2x32xf32> -> vector<2x32xf32>
    %8 = arith.negf %7 : vector<2x32xf32>
    %9 = math.exp %8 : vector<2x32xf32>
    %cst_9 = arith.constant 1.000000e+00 : f32
    %10 = vector.broadcast %cst_9 : f32 to vector<2x32xf32>
    %11 = arith.addf %10, %9 : vector<2x32xf32>
    %12 = arith.divf %10, %11 : vector<2x32xf32>
    %c0_10 = arith.constant 0 : index
    %c0_11 = arith.constant 0 : index
    %13 = vector.load %arg4[%c0_10, %c0_11] : memref<1x32xf32, #tpu.memory_space<vmem>>, vector<1x32xf32>
    %14 = vector.broadcast %13 : vector<1x32xf32> to vector<2x32xf32>
    %15 = arith.mulf %12, %14 : vector<2x32xf32>
    %16 = vector.shape_cast %15 : vector<2x32xf32> to vector<2x32x1xf32>
    %17 = vector.broadcast %16 : vector<2x32x1xf32> to vector<2x32x256xf32>
    %18 = arith.mulf %0, %17 : vector<2x32x256xf32>
    %c0_12 = arith.constant 0 : index
    %c0_13 = arith.constant 0 : index
    %19 = vector.load %arg5[%c0_12, %c0_13] : memref<1x256xf32, #tpu.memory_space<vmem>>, vector<1x256xf32>
    %20 = vector.shape_cast %19 : vector<1x256xf32> to vector<1x1x256xf32>
    %21 = vector.broadcast %20 : vector<1x1x256xf32> to vector<2x32x256xf32>
    %22 = arith.mulf %18, %21 : vector<2x32x256xf32>
    %c0_14 = arith.constant 0 : index
    %c0_15 = arith.constant 0 : index
    %c0_16 = arith.constant 0 : index
    %23 = vector.load %arg6[%c0_14, %c0_15, %c0_16] : memref<2x32x256xf32, #tpu.memory_space<vmem>>, vector<2x32x256xf32>
    tpu.vector_store %arg6[%c0_14, %c0_15, %c0_16], %22 {strides = array<i32>} : memref<2x32x256xf32, #tpu.memory_space<vmem>>, vector<2x32x256xf32>,
    return
  }
  func.func @transform_0(%arg0: i32) -> (i32, i32, i32) {
    %c0_i32 = arith.constant 0 : i32
    %c0_i32_0 = arith.constant 0 : i32
    %c0_i32_1 = arith.constant 0 : i32
    return %arg0, %c0_i32, %c0_i32_0 : i32, i32, i32
  }
  func.func @transform_1(%arg0: i32) -> (i32, i32) {
    %c0_i32 = arith.constant 0 : i32
    %c0_i32_0 = arith.constant 0 : i32
    %c0_i32_1 = arith.constant 0 : i32
    return %c0_i32, %c0_i32_0 : i32, i32
  }
  func.func @transform_2(%arg0: i32) -> (i32, i32) {
    %c0_i32 = arith.constant 0 : i32
    %c0_i32_0 = arith.constant 0 : i32
    %c0_i32_1 = arith.constant 0 : i32
    return %c0_i32, %c0_i32_0 : i32, i32
  }
  func.func @transform_3(%arg0: i32) -> (i32, i32) {
    %c0_i32 = arith.constant 0 : i32
    %c0_i32_0 = arith.constant 0 : i32
    %c0_i32_1 = arith.constant 0 : i32
    return %c0_i32, %c0_i32_0 : i32, i32
  }
  func.func @transform_4(%arg0: i32) -> (i32, i32) {
    %c0_i32 = arith.constant 0 : i32
    %c0_i32_0 = arith.constant 0 : i32
    %c0_i32_1 = arith.constant 0 : i32
    return %c0_i32, %c0_i32_0 : i32, i32
  }
  func.func @transform_5(%arg0: i32) -> (i32, i32, i32) {
    %c0_i32 = arith.constant 0 : i32
    %c0_i32_0 = arith.constant 0 : i32
    %c0_i32_1 = arith.constant 0 : i32
    return %arg0, %c0_i32, %c0_i32_0 : i32, i32, i32
  }
}

</mosaic_0001>

<llo_original>
// kernel: tpu_custom_call.1
$region0: #{tpu_custom_call.1}
  #allocation0 [shape = 'u32[]', space=smem, size = 0x4, offset = 0x4, fixed_abs, tag = 'smem constant byte address 0x4 - core index']
  #allocation1 [shape = 'u32[144,128]{1,0:T(1,128)}', space=vmem, size = 0x12000, scoped, tag = 'internal scratch']
  %s0 = inlined_call_operand.hbm [shape: f32[2,32,256], index: 0, kind: input, shape index: {}]
  %s1 = inlined_call_operand.vmem [shape: f32[32,2], index: 1, kind: input, shape index: {}]
  %s2 = inlined_call_operand.vmem [shape: f32[2,32], index: 2, kind: input, shape index: {}]
  %s3 = inlined_call_operand.vmem [shape: f32[1,32], index: 3, kind: input, shape index: {}]
  %s4 = inlined_call_operand.vmem [shape: f32[1,256], index: 4, kind: input, shape index: {}]
  %s5 = inlined_call_operand.hbm [shape: f32[2,32,256], index: 5, kind: output, shape index: {}]
  %s6 = sld [smem:[#allocation0]]
  $region34: #{tpu_custom_call.1} parent=0
    _
  %s8 = ssub.s32 1, %s6
  %s9 = scalar_select 0, %s8, %s6
  $region1: #{tpu_custom_call.1} parent=0
    #allocation2 [shape = 'u8[65536]{0}', space=vmem, size = 0x10000, scoped, tag = 'input window, operand 0, single buffered']
    #allocation3 [shape = 's32[1]{0}', space=sflag, size = 0x4, scoped, tag = 'scoped memory for tpu_custom_call.1']
    #allocation4 [shape = 's32[1]{0}', space=sflag, size = 0x4, scoped, tag = 'scoped memory for tpu_custom_call.1']
    #allocation5 [shape = 'u8[65536]{0}', space=vmem, size = 0x10000, scoped, tag = 'output window, operand 0, single buffered']
    %10 = vsyncpa [#allocation3], 0
    %11 = vsyncpa [#allocation4], 0
    // Predicated region
    $region2: #{tpu_custom_call.1} parent=1 // pred_check
      _
    $region3: #{tpu_custom_call.1} parent=1 // pred_check_branch
      %13 = sbr.rel (0) target = $region5
    $region4: #{tpu_custom_call.1} parent=1 // pred_region
      %s15 = ssub.s32 2048, 2048
      %16 = vsyncadd [#allocation3], %s15
      %s17 = sshll.u32 [#allocation2], 4
      %s18 = int_to_ptr.vmem [resolvable:$true] %s17
      %23 = dma.hbm_to_vmem [thread:$0]  %s0, 2048, %s18, [#allocation3], 256, 256, 16
    $region5: #{tpu_custom_call.1} parent=1 // pred_fallthru
      _
    // Predicated region
    $region6: #{tpu_custom_call.1} parent=1 // pred_check
      _
    $region7: #{tpu_custom_call.1} parent=1 // pred_check_branch
      %25 = sbr.rel (0) target = $region9
    $region8: #{tpu_custom_call.1} parent=1 // pred_region
      _
    $region9: #{tpu_custom_call.1} parent=1 // pred_fallthru
      _
    // Predicated region
    $region10: #{tpu_custom_call.1} parent=1 // pred_check
      _
    $region11: #{tpu_custom_call.1} parent=1 // pred_check_branch
      %27 = sbr.rel (0) target = $region13
    $region12: #{tpu_custom_call.1} parent=1 // pred_region
      _
    $region13: #{tpu_custom_call.1} parent=1 // pred_fallthru
      _
    // Predicated region
    $region14: #{tpu_custom_call.1} parent=1 // pred_check
      _
    $region15: #{tpu_custom_call.1} parent=1 // pred_check_branch
      %29 = sbr.rel (0) target = $region17
    $region16: #{tpu_custom_call.1} parent=1 // pred_region
      _
    $region17: #{tpu_custom_call.1} parent=1 // pred_fallthru
      _
    // Predicated region
    $region18: #{tpu_custom_call.1} parent=1 // pred_check
      _
    $region19: #{tpu_custom_call.1} parent=1 // pred_check_branch
      %31 = sbr.rel (0) target = $region21
    $region20: #{tpu_custom_call.1} parent=1 // pred_region
      _
    $region21: #{tpu_custom_call.1} parent=1 // pred_fallthru
      _
    // Predicated region
    $region22: #{tpu_custom_call.1} parent=1 // pred_check
      _
    $region23: #{tpu_custom_call.1} parent=1 // pred_check_branch
      %33 = sbr.rel (0) target = $region25
    $region24: #{tpu_custom_call.1} parent=1 // pred_region
      %34 = dma.done [#allocation3], 2048
    $region25: #{tpu_custom_call.1} parent=1 // pred_fallthru
      _
    %v35 = vld [vmem:[#allocation2] sm:$0xff]
    %v36 = vld [vmem:[#allocation2 + $0x8] sm:$0xff]
    %v37 = vld [vmem:[#allocation2 + $0x10] sm:$0xff]
    %v38 = vld [vmem:[#allocation2 + $0x18] sm:$0xff]
    %v39 = vld [vmem:[#allocation2 + $0x20] sm:$0xff]
    %v40 = vld [vmem:[#allocation2 + $0x28] sm:$0xff]
    %v41 = vld [vmem:[#allocation2 + $0x30] sm:$0xff]
    %v42 = vld [vmem:[#allocation2 + $0x38] sm:$0xff]
    %v43 = vld [vmem:[#allocation2 + $0x40] sm:$0xff]
    %v44 = vld [vmem:[#allocation2 + $0x48] sm:$0xff]
    %v45 = vld [vmem:[#allocation2 + $0x50] sm:$0xff]
    %v46 = vld [vmem:[#allocation2 + $0x58] sm:$0xff]
    %v47 = vld [vmem:[#allocation2 + $0x60] sm:$0xff]
    %v48 = vld [vmem:[#allocation2 + $0x68] sm:$0xff]
    %v49 = vld [vmem:[#allocation2 + $0x70] sm:$0xff]
    %v50 = vld [vmem:[#allocation2 + $0x78] sm:$0xff]
    %v51 = vadd.f32 %v35, %v36
    %52 = vadd.xlane.f32.xlu0 %v51
    %v53 = vpop.xlane.xlu0 %52
    %v54 = vadd.f32 %v37, %v38
    %55 = vadd.xlane.f32.xlu0 %v54
    %v56 = vpop.xlane.xlu0 %55
    %v57 = vadd.f32 %v39, %v40
    %58 = vadd.xlane.f32.xlu0 %v57
    %v59 = vpop.xlane.xlu0 %58
    %v60 = vadd.f32 %v41, %v42
    %61 = vadd.xlane.f32.xlu0 %v60
    %v62 = vpop.xlane.xlu0 %61
    %v63 = vadd.f32 %v43, %v44
    %64 = vadd.xlane.f32.xlu0 %v63
    %v65 = vpop.xlane.xlu0 %64
    %v66 = vadd.f32 %v45, %v46
    %67 = vadd.xlane.f32.xlu0 %v66
    %v68 = vpop.xlane.xlu0 %67
    %v69 = vadd.f32 %v47, %v48
    %70 = vadd.xlane.f32.xlu0 %v69
    %v71 = vpop.xlane.xlu0 %70
    %v72 = vadd.f32 %v49, %v50
    %73 = vadd.xlane.f32.xlu0 %v72
    %v74 = vpop.xlane.xlu0 %73
    %v75 = vld [vmem:[%s1] sm:$0xff]
    %v76 = vld [vmem:[%s1 + $0x8] sm:$0xff]
    %v77 = vld [vmem:[%s1 + $0x10] sm:$0xff]
    %v78 = vld [vmem:[%s1 + $0x18] sm:$0xff]
    %v87 = vlaneseq
    %v88 = vand.u32 %v87, 127
    %v89 = vlaneseq
    %v90 = vshrl.u32 %v89, 7
    %v91 = vsub.s32 %v88, %v90
    %v92 = vrot.slane %v53, %v91
    %v93 = vadd.s32 %v88, 4294967288
    %v94 = vlaneseq
    %v95 = vshrl.u32 %v94, 7
    %v96 = vsub.s32 %v93, %v95
    %v97 = vrot.slane %v56, %v96
    %vm98 = vcmask 130112
    %v99 = vsel %vm98, %v97, %v92
    %v100 = vadd.s32 %v88, 4294967280
    %v101 = vlaneseq
    %v102 = vshrl.u32 %v101, 7
    %v103 = vsub.s32 %v100, %v102
    %v104 = vrot.slane %v59, %v103
    %vm105 = vcmask 195712
    %v106 = vsel %vm105, %v104, %v99
    %v107 = vadd.s32 %v88, 4294967272
    %v108 = vlaneseq
    %v109 = vshrl.u32 %v108, 7
    %v110 = vsub.s32 %v107, %v109
    %v111 = vrot.slane %v62, %v110
    %vm112 = vcmask 261312
    %v113 = vsel %vm112, %v111, %v106
    %v114 = vlaneseq
    %v115 = vshrl.u32 %v114, 7
    %v116 = vsub.s32 %v88, %v115
    %v117 = vrot.slane %v65, %v116
    %v118 = vlaneseq
    %v119 = vshrl.u32 %v118, 7
    %v120 = vsub.s32 %v93, %v119
    %v121 = vrot.slane %v68, %v120
    %v122 = vsel %vm98, %v121, %v117
    %v123 = vlaneseq
    %v124 = vshrl.u32 %v123, 7
    %v125 = vsub.s32 %v100, %v124
    %v126 = vrot.slane %v71, %v125
    %v127 = vsel %vm105, %v126, %v122
    %v128 = vlaneseq
    %v129 = vshrl.u32 %v128, 7
    %v130 = vsub.s32 %v107, %v129
    %v131 = vrot.slane %v74, %v130
    %v132 = vsel %vm112, %v131, %v127
    %vm133 = vcmask 1041409
    %v134 = vsel %vm133, %v132, %v113
    %vm135 = vcmask 261120
    %v136 = vsel %vm135, %v134, 0
    %138 = vmatprep.subr.mxu0 0.0
    %139 = vmatpush1.msra.mxu0 0.0
    %140 = vmatprep.subr.mxu0 0.0
    %141 = vmatpush1.msra.mxu0 0.0
    %142 = vmatprep.subr.mxu0 0.0
    %143 = vmatpush1.msra.mxu0 0.0
    %144 = vmatprep.subr.mxu0 0.0
    %145 = vmatpush1.msra.mxu0 0.0
    %146 = vmatprep.subr.mxu0 0.0
    %147 = vmatpush1.msra.mxu0 0.0
    %148 = vmatprep.subr.mxu0 0.0
    %149 = vmatpush1.msra.mxu0 0.0
    %150 = vmatprep.subr.mxu0 0.0
    %151 = vmatpush1.msra.mxu0 0.0
    %152 = vmatprep.subr.mxu0 0.0
    %153 = vmatpush1.msra.mxu0 0.0
    %154 = vmatprep.subr.mxu0 0.0
    %155 = vmatpush1.msra.mxu0 0.0
    %156 = vmatprep.subr.mxu0 0.0
    %157 = vmatpush1.msra.mxu0 0.0
    %158 = vmatprep.subr.mxu0 0.0
    %159 = vmatpush1.msra.mxu0 0.0
    %160 = vmatprep.subr.mxu0 0.0
    %161 = vmatpush1.msra.mxu0 0.0
    %162 = vmatprep.subr.mxu0 0.0
    %163 = vmatpush1.msra.mxu0 %v78
    %164 = vmatprep.subr.mxu0 0.0
    %165 = vmatpush1.msra.mxu0 %v77
    %166 = vmatprep.subr.mxu0 0.0
    %167 = vmatpush1.msra.mxu0 %v76
    %168 = vmatprep.subr.mxu0 0.0
    %169 = vmatpush1.msra.mxu0 %v75
    %170 = vmatprep.subr.mxu0 0.0
    %171 = vmatpush2.msra.mxu0 0.0
    %172 = vmatprep.subr.mxu0 0.0
    %173 = vmatpush2.msra.mxu0 0.0
    %174 = vmatprep.subr.mxu0 0.0
    %175 = vmatpush2.msra.mxu0 0.0
    %176 = vmatprep.subr.mxu0 0.0
    %177 = vmatpush2.msra.mxu0 0.0
    %178 = vmatprep.subr.mxu0 0.0
    %179 = vmatpush2.msra.mxu0 0.0
    %180 = vmatprep.subr.mxu0 0.0
    %181 = vmatpush2.msra.mxu0 0.0
    %182 = vmatprep.subr.mxu0 0.0
    %183 = vmatpush2.msra.mxu0 0.0
    %184 = vmatprep.subr.mxu0 0.0
    %185 = vmatpush2.msra.mxu0 0.0
    %186 = vmatprep.subr.mxu0 0.0
    %187 = vmatpush2.msra.mxu0 0.0
    %188 = vmatprep.subr.mxu0 0.0
    %189 = vmatpush2.msra.mxu0 0.0
    %190 = vmatprep.subr.mxu0 0.0
    %191 = vmatpush2.msra.mxu0 0.0
    %192 = vmatprep.subr.mxu0 0.0
    %193 = vmatpush2.msra.mxu0 0.0
    %194 = vmatprep.subr.mxu0 0.0
    %195 = vmatpush2.msra.mxu0 0.0
    %196 = vmatprep.subr.mxu0 0.0
    %197 = vmatpush2.msra.mxu0 0.0
    %198 = vmatprep.subr.mxu0 0.0
    %199 = vmatpush2.msra.mxu0 0.0
    %200 = vmatprep.subr.mxu0 0.0
    %201 = vmatpush2.msra.mxu0 0.0
    %202 = vmatprep.mubr.f32.mxu0 0.0
    %203 = vmatmul.mubr.f32.gmra.mxu0 %v136
    %v204 = vpop.f32.mrf.mxu0
    %v205 = vadd.f32 0.0, %v204
    %v206 = vpop.f32.mrf.mxu0
    %207 = vdwg.mxu0
    %v208 = vmax.f32 %v205, 0.0
    %v209 = vld [vmem:[%s2] sm:$0x3]
    %vm210 = vcmask 15360
    %v212 = vsel %vm210, %v208, 0
    %vm214 = vcmask 1041408
    %v216 = vsel %vm214, %v209, 0
    %218 = vmatprep.subr.mxu0 0.0
    %219 = vmatpush1.msra.mxu0 0.0
    %220 = vmatprep.subr.mxu0 0.0
    %221 = vmatpush1.msra.mxu0 0.0
    %222 = vmatprep.subr.mxu0 0.0
    %223 = vmatpush1.msra.mxu0 0.0
    %224 = vmatprep.subr.mxu0 0.0
    %225 = vmatpush1.msra.mxu0 0.0
    %226 = vmatprep.subr.mxu0 0.0
    %227 = vmatpush1.msra.mxu0 0.0
    %228 = vmatprep.subr.mxu0 0.0
    %229 = vmatpush1.msra.mxu0 0.0
    %230 = vmatprep.subr.mxu0 0.0
    %231 = vmatpush1.msra.mxu0 0.0
    %232 = vmatprep.subr.mxu0 0.0
    %233 = vmatpush1.msra.mxu0 0.0
    %234 = vmatprep.subr.mxu0 0.0
    %235 = vmatpush1.msra.mxu0 0.0
    %236 = vmatprep.subr.mxu0 0.0
    %237 = vmatpush1.msra.mxu0 0.0
    %238 = vmatprep.subr.mxu0 0.0
    %239 = vmatpush1.msra.mxu0 0.0
    %240 = vmatprep.subr.mxu0 0.0
    %241 = vmatpush1.msra.mxu0 0.0
    %242 = vmatprep.subr.mxu0 0.0
    %243 = vmatpush1.msra.mxu0 0.0
    %244 = vmatprep.subr.mxu0 0.0
    %245 = vmatpush1.msra.mxu0 0.0
    %246 = vmatprep.subr.mxu0 0.0
    %247 = vmatpush1.msra.mxu0 0.0
    %248 = vmatprep.subr.mxu0 0.0
    %249 = vmatpush1.msra.mxu0 %v216
    %250 = vmatprep.subr.mxu0 0.0
    %251 = vmatpush2.msra.mxu0 0.0
    %252 = vmatprep.subr.mxu0 0.0
    %253 = vmatpush2.msra.mxu0 0.0
    %254 = vmatprep.subr.mxu0 0.0
    %255 = vmatpush2.msra.mxu0 0.0
    %256 = vmatprep.subr.mxu0 0.0
    %257 = vmatpush2.msra.mxu0 0.0
    %258 = vmatprep.subr.mxu0 0.0
    %259 = vmatpush2.msra.mxu0 0.0
    %260 = vmatprep.subr.mxu0 0.0
    %261 = vmatpush2.msra.mxu0 0.0
    %262 = vmatprep.subr.mxu0 0.0
    %263 = vmatpush2.msra.mxu0 0.0
    %264 = vmatprep.subr.mxu0 0.0
    %265 = vmatpush2.msra.mxu0 0.0
    %266 = vmatprep.subr.mxu0 0.0
    %267 = vmatpush2.msra.mxu0 0.0
    %268 = vmatprep.subr.mxu0 0.0
    %269 = vmatpush2.msra.mxu0 0.0
    %270 = vmatprep.subr.mxu0 0.0
    %271 = vmatpush2.msra.mxu0 0.0
    %272 = vmatprep.subr.mxu0 0.0
    %273 = vmatpush2.msra.mxu0 0.0
    %274 = vmatprep.subr.mxu0 0.0
    %275 = vmatpush2.msra.mxu0 0.0
    %276 = vmatprep.subr.mxu0 0.0
    %277 = vmatpush2.msra.mxu0 0.0
    %278 = vmatprep.subr.mxu0 0.0
    %279 = vmatpush2.msra.mxu0 0.0
    %280 = vmatprep.subr.mxu0 0.0
    %281 = vmatpush2.msra.mxu0 0.0
    %282 = vmatprep.mubr.f32.mxu0 0.0
    %283 = vmatmul.mubr.f32.gmra.mxu0 %v212
    %v284 = vpop.f32.mrf.mxu0
    %v285 = vadd.f32 0.0, %v284
    %v286 = vpop.f32.mrf.mxu0
    %287 = vdwg.mxu0
    %v288 = vxor.u32 %v285, 2147483648
    %v289 = vmul.f32 %v288, 1.442695
    %v290 = vpow.pop %v289
    %v291 = vadd.f32 %v290, 1.0
    %v292 = vrcp.pop %v291
    %v293 = vmul.f32 1.0, %v292
    %v294 = vld [vmem:[%s3] sm:$0x1]
    %v296 = vlaneseq
    %v297 = vshrl.u32 %v296, 7
    %v298 = vsub.s32 0, %v297
    %v299 = vrot.slane %v294, %v298
    %v301 = vmul.f32 %v293, %v299
    %v302 = vlaneseq
    %v303 = vshrl.u32 %v302, 7
    %v304 = vsub.s32 0, %v303
    %v305 = vrot.slane %v301, %v304
    %307 = vbcast.lane.b32.xlu0 %v305, 256
    %v308 = vpop.permute.xlu0 %307
    %s310 = sor.u32 256, 8
    %311 = vbcast.lane.b32.xlu0 %v305, %s310
    %v312 = vpop.permute.xlu0 %311
    %s314 = sor.u32 256, 16
    %315 = vbcast.lane.b32.xlu0 %v305, %s314
    %v316 = vpop.permute.xlu0 %315
    %s318 = sor.u32 256, 24
    %319 = vbcast.lane.b32.xlu0 %v305, %s318
    %v320 = vpop.permute.xlu0 %319
    %v321 = vlaneseq
    %v322 = vshrl.u32 %v321, 7
    %v323 = vsub.s32 1, %v322
    %v324 = vrot.slane %v301, %v323
    %326 = vbcast.lane.b32.xlu0 %v324, 256
    %v327 = vpop.permute.xlu0 %326
    %s329 = sor.u32 256, 8
    %330 = vbcast.lane.b32.xlu0 %v324, %s329
    %v331 = vpop.permute.xlu0 %330
    %s333 = sor.u32 256, 16
    %334 = vbcast.lane.b32.xlu0 %v324, %s333
    %v335 = vpop.permute.xlu0 %334
    %s337 = sor.u32 256, 24
    %338 = vbcast.lane.b32.xlu0 %v324, %s337
    %v339 = vpop.permute.xlu0 %338
    %v340 = vmul.f32 %v35, %v308
    %v341 = vmul.f32 %v36, %v308
    %v342 = vmul.f32 %v37, %v312
    %v343 = vmul.f32 %v38, %v312
    %v344 = vmul.f32 %v39, %v316
    %v345 = vmul.f32 %v40, %v316
    %v346 = vmul.f32 %v41, %v320
    %v347 = vmul.f32 %v42, %v320
    %v348 = vmul.f32 %v43, %v327
    %v349 = vmul.f32 %v44, %v327
    %v350 = vmul.f32 %v45, %v331
    %v351 = vmul.f32 %v46, %v331
    %v352 = vmul.f32 %v47, %v335
    %v353 = vmul.f32 %v48, %v335
    %v354 = vmul.f32 %v49, %v339
    %v355 = vmul.f32 %v50, %v339
    %v356 = vld [vmem:[%s4] sm:$0x3]
    %v358 = vlaneseq
    %v359 = vshrl.u32 %v358, 7
    %v360 = vsub.s32 0, %v359
    %v361 = vrot.slane %v356, %v360
    %v362 = vlaneseq
    %v363 = vshrl.u32 %v362, 7
    %v364 = vsub.s32 1, %v363
    %v365 = vrot.slane %v356, %v364
    %v368 = vmul.f32 %v340, %v361
    %v369 = vmul.f32 %v341, %v365
    %v370 = vmul.f32 %v342, %v361
    %v371 = vmul.f32 %v343, %v365
    %v372 = vmul.f32 %v344, %v361
    %v373 = vmul.f32 %v345, %v365
    %v374 = vmul.f32 %v346, %v361
    %v375 = vmul.f32 %v347, %v365
    %v376 = vmul.f32 %v348, %v361
    %v377 = vmul.f32 %v349, %v365
    %v378 = vmul.f32 %v350, %v361
    %v379 = vmul.f32 %v351, %v365
    %v380 = vmul.f32 %v352, %v361
    %v381 = vmul.f32 %v353, %v365
    %v382 = vmul.f32 %v354, %v361
    %v383 = vmul.f32 %v355, %v365
    %384 = vst [vmem:[#allocation5] sm:$0xff] %v368
    %385 = vst [vmem:[#allocation5 + $0x8] sm:$0xff] %v369
    %386 = vst [vmem:[#allocation5 + $0x10] sm:$0xff] %v370
    %387 = vst [vmem:[#allocation5 + $0x18] sm:$0xff] %v371
    %388 = vst [vmem:[#allocation5 + $0x20] sm:$0xff] %v372
    %389 = vst [vmem:[#allocation5 + $0x28] sm:$0xff] %v373
    %390 = vst [vmem:[#allocation5 + $0x30] sm:$0xff] %v374
    %391 = vst [vmem:[#allocation5 + $0x38] sm:$0xff] %v375
    %392 = vst [vmem:[#allocation5 + $0x40] sm:$0xff] %v376
    %393 = vst [vmem:[#allocation5 + $0x48] sm:$0xff] %v377
    %394 = vst [vmem:[#allocation5 + $0x50] sm:$0xff] %v378
    %395 = vst [vmem:[#allocation5 + $0x58] sm:$0xff] %v379
    %396 = vst [vmem:[#allocation5 + $0x60] sm:$0xff] %v380
    %397 = vst [vmem:[#allocation5 + $0x68] sm:$0xff] %v381
    %398 = vst [vmem:[#allocation5 + $0x70] sm:$0xff] %v382
    %399 = vst [vmem:[#allocation5 + $0x78] sm:$0xff] %v383
    // Predicated region
    $region26: #{tpu_custom_call.1} parent=1 // pred_check
      _
    $region27: #{tpu_custom_call.1} parent=1 // pred_check_branch
      %401 = sbr.rel (0) target = $region29
    $region28: #{tpu_custom_call.1} parent=1 // pred_region
      %s403 = ssub.s32 2048, 2048
      %404 = vsyncadd [#allocation4], %s403
      %s405 = sshll.u32 [#allocation5], 4
      %s406 = int_to_ptr.vmem [resolvable:$true] %s405
      %411 = dma.vmem_to_hbm [thread:$0]  %s406, 2048, %s5, [#allocation4], 256, 256, 16
    $region29: #{tpu_custom_call.1} parent=1 // pred_fallthru
      _
    // Predicated region
    $region30: #{tpu_custom_call.1} parent=1 // pred_check
      _
    $region31: #{tpu_custom_call.1} parent=1 // pred_check_branch
      %413 = sbr.rel (0) target = $region33
    $region32: #{tpu_custom_call.1} parent=1 // pred_region
      %414 = dma.done [#allocation4], 2048
    $region33: #{tpu_custom_call.1} parent=1 // pred_fallthru
      _
    %415 = vsyncpa [#allocation3], 1
    %416 = vsyncpa [#allocation4], 1

</llo_original>
